<compile_context>
chip_gen: v7x
topology: tpu7x:2x2x1
jax: 0.10.0
libtpu: 0.0.40
codegen_flags: <defaults>
</compile_context>

<pallas_src>
import functools

import jax
import jax.numpy as jnp
import numpy as np
from jax.experimental import pallas as pl
from jax.experimental.pallas import tpu as pltpu


def _ce_kernel(i_ref, m_ref, o_ref):
    """Cross-entropy only (k is None). Blocks: i (1,TN), m (TN,C), o (1,TN)."""
    tn, c = m_ref.shape
    m = m_ref[...].astype(jnp.float32)                        # (TN, C)
    idx = i_ref[...].reshape(tn, 1)                           # (1,TN) -> (TN,1)

    mmax = jnp.max(m, axis=-1, keepdims=True)
    ex = jnp.exp(m - mmax)
    lse = mmax + jnp.log(jnp.sum(ex, axis=-1, keepdims=True))

    col = jax.lax.broadcasted_iota(jnp.int32, (tn, c), 1)
    m_tgt = jnp.sum(jnp.where(col == idx, m, 0.0), axis=-1, keepdims=True)

    o_ref[...] = (lse - m_tgt).reshape(1, tn)                 # lane-dense store


def _cov_qce_kernel(i_ref, m_ref, kf_ref, eye_ref, seli_ref, selj_ref, o_ref):
    """CE + 0.5 * <k, diag(p) - p p^T>, with k streamed flat as (TN, C*C)."""
    tn, c = m_ref.shape

    m = m_ref[...].astype(jnp.float32)                        # (TN, C)
    idx = i_ref[...].reshape(tn, 1)                           # (1,TN) -> (TN,1)

    # --- stable logsumexp / softmax --------------------------------------
    mmax = jnp.max(m, axis=-1, keepdims=True)                 # (TN, 1)
    ex = jnp.exp(m - mmax)                                    # (TN, C)
    sumex = jnp.sum(ex, axis=-1, keepdims=True)               # (TN, 1)
    lse = mmax + jnp.log(sumex)                               # (TN, 1)
    # approx=False: the reciprocal is O(TN) work (off the critical path) and
    # the exact form keeps the demo's 1e-5 tolerance safe on all chips.
    p = ex * pl.reciprocal(sumex, approx=False)               # (TN, C)

    # --- gather m at the target class via a one-hot mask -----------------
    col = jax.lax.broadcasted_iota(jnp.int32, (tn, c), 1)
    m_tgt = jnp.sum(jnp.where(col == idx, m, 0.0), axis=-1, keepdims=True)
    ce = lse - m_tgt                                          # (TN, 1)

    # --- fused quadratic curvature term (single pass over flat k) --------
    #   quad = 0.5 * sum_l kf[l] * p_i(l) * (eye(l) - p_j(l)),  l = i*C + j
    # p_i / p_j expansions over the flat lane axis via tiny MXU matmuls with
    # constant 0/1 selection matrices (exact: each output picks one p value).
    hi = jax.lax.Precision.HIGHEST
    p_i = jnp.dot(p, seli_ref[...], precision=hi,
                  preferred_element_type=jnp.float32)         # (TN, C*C)
    p_j = jnp.dot(p, selj_ref[...], precision=hi,
                  preferred_element_type=jnp.float32)         # (TN, C*C)
    w = p_i * (eye_ref[...] - p_j)                            # (TN, C*C)

    kf = kf_ref[...].astype(jnp.float32)                      # (TN, C*C)
    quad = 0.5 * jnp.sum(kf * w, axis=-1, keepdims=True)      # (TN, 1)

    o_ref[...] = (ce + quad).reshape(1, tn)                   # lane-dense store


def _pick_row_tile(n_rows, row_bytes, target_bytes=2 << 20):
    """Largest divisor of n_rows (preferring multiples of 8) with a ~2 MiB
    dominant block, so the pipeline runs near the HBM roofline on
    v5e/v6e/v7x without stressing VMEM."""
    cap = max(8, target_bytes // max(int(row_bytes), 1))
    if n_rows <= cap:
        return n_rows
    t = min(cap, n_rows)
    t -= t % 8
    while t >= 8:                       # prefer sublane-aligned tiles
        if n_rows % t == 0:
            return t
        t -= 8
    t = min(cap, n_rows)
    while t >= 1:                       # fall back to any divisor
        if n_rows % t == 0:
            return t
        t -= 1
    return n_rows


@functools.partial(jax.jit, static_argnames=("tn",))
def cov_quadratic_cross_entropy_loss(m, k, i, *, tn=None):
    """m: (S,B,C), k: (S,B,C,C) or None, i: (S,B) int -> (S,B) float32."""
    S, B, C = m.shape
    CC = C * C
    N = S * B

    m2 = m.reshape(N, C)                                      # native dtype
    dom_itemsize = jnp.dtype(k.dtype).itemsize if k is not None else \
        jnp.dtype(m.dtype).itemsize
    if tn is None:
        tn = _pick_row_tile(N, CC * dom_itemsize if k is not None
                            else C * dom_itemsize)
    assert N % tn == 0, "row count must be divisible by the row tile"
    G = N // tn

    i2 = i.astype(jnp.int32).reshape(G, tn)                   # lane-dense idx

    out_shape = jax.ShapeDtypeStruct((G, tn), jnp.float32)
    i_spec = pl.BlockSpec((1, tn), lambda n: (n, 0))
    m_spec = pl.BlockSpec((tn, C), lambda n: (n, 0))
    out_spec = pl.BlockSpec((1, tn), lambda n: (n, 0))
    cparams = pltpu.CompilerParams(
        dimension_semantics=("parallel",),
        vmem_limit_bytes=48 * 1024 * 1024,
    )

    if k is None:
        cost = pl.CostEstimate(
            flops=int(8 * N * C),
            transcendentals=int(N * (C + 1)),
            bytes_accessed=int(N * C * jnp.dtype(m.dtype).itemsize + 8 * N),
        )
        out = pl.pallas_call(
            _ce_kernel,
            out_shape=out_shape,
            grid_spec=pltpu.PrefetchScalarGridSpec(
                num_scalar_prefetch=0,
                grid=(G,),
                in_specs=[i_spec, m_spec],
                out_specs=out_spec,
            ),
            compiler_params=cparams,
            cost_estimate=cost,
        )(i2, m2)
        return out.reshape(S, B)

    # lane-dense flat k (pure leading/trailing-dim collapse: no data movement)
    k2 = k.reshape(N, CC)

    # constant selection matrices for the flat l = i*C + j layout (host-built,
    # DMA'd once: their block index never changes across the grid).
    li = np.arange(CC, dtype=np.int64) // C
    lj = np.arange(CC, dtype=np.int64) % C
    cls = np.arange(C, dtype=np.int64)
    eye_flat = jnp.asarray((li == lj).astype(np.float32).reshape(1, CC))
    sel_i = jnp.asarray((li[None, :] == cls[:, None]).astype(np.float32))
    sel_j = jnp.asarray((lj[None, :] == cls[:, None]).astype(np.float32))

    cost = pl.CostEstimate(
        flops=int(N * (4 * C * CC + 6 * CC + 12 * C)),
        transcendentals=int(N * (C + 1)),
        bytes_accessed=int(N * CC * jnp.dtype(k.dtype).itemsize
                           + N * C * jnp.dtype(m.dtype).itemsize + 8 * N),
    )
    out = pl.pallas_call(
        _cov_qce_kernel,
        out_shape=out_shape,
        grid_spec=pltpu.PrefetchScalarGridSpec(
            num_scalar_prefetch=0,
            grid=(G,),
            in_specs=[
                i_spec,
                m_spec,
                pl.BlockSpec((tn, CC), lambda n: (n, 0)),
                pl.BlockSpec((1, CC), lambda n: (0, 0)),
                pl.BlockSpec((C, CC), lambda n: (0, 0)),
                pl.BlockSpec((C, CC), lambda n: (0, 0)),
            ],
            out_specs=out_spec,
        ),
        compiler_params=cparams,
        cost_estimate=cost,
    )(i2, m2, k2, eye_flat, sel_i, sel_j)
    return out.reshape(S, B)


def _reference(m, k, i):
    """Plain-JAX reference mirroring the PyTorch module."""
    lse = jax.nn.logsumexp(m, axis=-1)
    gathered = jnp.take_along_axis(m, i[..., None], axis=-1)[..., 0]
    ce = lse - gathered
    if k is None:
        return ce
    p = jax.nn.softmax(m, axis=-1)
    h = (jnp.einsum('...i,ij->...ij', p, jnp.eye(m.shape[-1], dtype=m.dtype))
         - p[..., :, None] * p[..., None, :])
    quad = 0.5 * jnp.einsum('sbij,sbij->sb', k, h)
    return ce + quad


if __name__ == "__main__":
    S, B, C = 2, 8, 16
    key = jax.random.PRNGKey(0)
    km, kk, ki = jax.random.split(key, 3)

    m = jax.random.normal(km, (S, B, C), dtype=jnp.float32)
    k = jax.random.normal(kk, (S, B, C, C), dtype=jnp.float32)
    i = jax.random.randint(ki, (S, B), 0, C, dtype=jnp.int32)

    out = jax.block_until_ready(cov_quadratic_cross_entropy_loss(m, k, i))
    ref = _reference(m, k, i)
    assert out.shape == (S, B) and out.dtype == jnp.float32
    assert jnp.allclose(out, ref, atol=1e-5, rtol=1e-5), (out, ref)

    # k == None path (pure cross-entropy, no fake-k HBM traffic)
    out_nok = jax.block_until_ready(cov_quadratic_cross_entropy_loss(m, None, i))
    ref_nok = _reference(m, None, i)
    assert jnp.allclose(out_nok, ref_nok, atol=1e-5, rtol=1e-5), (out_nok, ref_nok)

    print("KERNEL_OK")
</pallas_src>

<mosaic_0001>
module attributes {stable_mosaic.version = 11 : i64} {
  func.func @_cov_qce_kernel(%arg0: i32, %arg1: memref<1x16xi32, #tpu.memory_space<vmem>>, %arg2: memref<16x16xf32, #tpu.memory_space<vmem>>, %arg3: memref<16x256xf32, #tpu.memory_space<vmem>>, %arg4: memref<1x256xf32, #tpu.memory_space<vmem>>, %arg5: memref<16x256xf32, #tpu.memory_space<vmem>>, %arg6: memref<16x256xf32, #tpu.memory_space<vmem>>, %arg7: memref<1x16xf32, #tpu.memory_space<vmem>>) attributes {dimension_semantics = [#tpu.dimension_semantics<parallel>], iteration_bounds = array<i64: 1>, scalar_prefetch = 0 : i64, scratch_operands = 0 : i64, tpu.core_type = #tpu.core_type<tc>, window_params = [{transform_indices = @transform_0, window_bounds = array<i64: 1, 16>}, {transform_indices = @transform_1, window_bounds = array<i64: 16, 16>}, {transform_indices = @transform_2, window_bounds = array<i64: 16, 256>}, {pipeline_mode = #tpu.pipeline_mode<synchronous>, transform_indices = @transform_3, window_bounds = array<i64: 1, 256>}, {pipeline_mode = #tpu.pipeline_mode<synchronous>, transform_indices = @transform_4, window_bounds = array<i64: 16, 256>}, {pipeline_mode = #tpu.pipeline_mode<synchronous>, transform_indices = @transform_5, window_bounds = array<i64: 16, 256>}, {transform_indices = @transform_6, window_bounds = array<i64: 1, 16>}]} {
    %c0 = arith.constant 0 : index
    %c0_0 = arith.constant 0 : index
    %0 = vector.load %arg2[%c0, %c0_0] : memref<16x16xf32, #tpu.memory_space<vmem>>, vector<16x16xf32>
    %c0_1 = arith.constant 0 : index
    %c0_2 = arith.constant 0 : index
    %1 = vector.load %arg1[%c0_1, %c0_2] : memref<1x16xi32, #tpu.memory_space<vmem>>, vector<1x16xi32>
    %2 = vector.shape_cast %1 : vector<1x16xi32> to vector<16x1xi32>
    %cst = arith.constant dense<0xFF800000> : vector<16xf32>
    %3 = vector.multi_reduction <maximumf>, %0, %cst [1] : vector<16x16xf32> to vector<16xf32>
    %4 = vector.shape_cast %3 : vector<16xf32> to vector<16x1xf32>
    %5 = vector.broadcast %4 : vector<16x1xf32> to vector<16x16xf32>
    %6 = arith.subf %0, %5 : vector<16x16xf32>
    %7 = math.exp %6 : vector<16x16xf32>
    %cst_3 = arith.constant dense<0.000000e+00> : vector<16xf32>
    %8 = vector.multi_reduction <add>, %7, %cst_3 [1] : vector<16x16xf32> to vector<16xf32>
    %9 = vector.shape_cast %8 : vector<16xf32> to vector<16x1xf32>
    %10 = math.log %9 : vector<16x1xf32>
    %11 = arith.addf %4, %10 : vector<16x1xf32>
    %12 = tpu.reciprocal %9 : vector<16x1xf32> -> vector<16x1xf32>
    %13 = vector.broadcast %12 : vector<16x1xf32> to vector<16x16xf32>
    %14 = arith.mulf %7, %13 : vector<16x16xf32>
    %15 = tpu.iota {dimensions = array<i32: 1>} : vector<16x16xi32>
    %16 = vector.broadcast %2 : vector<16x1xi32> to vector<16x16xi32>
    %17 = arith.cmpi eq, %15, %16 : vector<16x16xi32>
    %cst_4 = arith.constant 0.000000e+00 : f32
    %18 = vector.broadcast %cst_4 : f32 to vector<16x16xf32>
    %19 = arith.select %17, %0, %18 : vector<16x16xi1>, vector<16x16xf32>
    %cst_5 = arith.constant dense<0.000000e+00> : vector<16xf32>
    %20 = vector.multi_reduction <add>, %19, %cst_5 [1] : vector<16x16xf32> to vector<16xf32>
    %21 = vector.shape_cast %20 : vector<16xf32> to vector<16x1xf32>
    %22 = arith.subf %11, %21 : vector<16x1xf32>
    %c0_6 = arith.constant 0 : index
    %c0_7 = arith.constant 0 : index
    %23 = vector.load %arg5[%c0_6, %c0_7] : memref<16x256xf32, #tpu.memory_space<vmem>>, vector<16x256xf32>
    %cst_8 = arith.constant dense<0.000000e+00> : vector<16x256xf32>
    %24 = tpu.matmul %14, %23, %cst_8 {dimension_numbers = #tpu.dot_dimension_numbers<[1], [0], [0], [1], [0, 0, 1, 1], [], []>, precision = #tpu.contract_precision<fp32>} : vector<16x16xf32>, vector<16x256xf32>, vector<16x256xf32> -> vector<16x256xf32>
    %c0_9 = arith.constant 0 : index
    %c0_10 = arith.constant 0 : index
    %25 = vector.load %arg6[%c0_9, %c0_10] : memref<16x256xf32, #tpu.memory_space<vmem>>, vector<16x256xf32>
    %cst_11 = arith.constant dense<0.000000e+00> : vector<16x256xf32>
    %26 = tpu.matmul %14, %25, %cst_11 {dimension_numbers = #tpu.dot_dimension_numbers<[1], [0], [0], [1], [0, 0, 1, 1], [], []>, precision = #tpu.contract_precision<fp32>} : vector<16x16xf32>, vector<16x256xf32>, vector<16x256xf32> -> vector<16x256xf32>
    %c0_12 = arith.constant 0 : index
    %c0_13 = arith.constant 0 : index
    %27 = vector.load %arg4[%c0_12, %c0_13] : memref<1x256xf32, #tpu.memory_space<vmem>>, vector<1x256xf32>
    %28 = vector.broadcast %27 : vector<1x256xf32> to vector<16x256xf32>
    %29 = arith.subf %28, %26 : vector<16x256xf32>
    %30 = arith.mulf %24, %29 : vector<16x256xf32>
    %c0_14 = arith.constant 0 : index
    %c0_15 = arith.constant 0 : index
    %31 = vector.load %arg3[%c0_14, %c0_15] : memref<16x256xf32, #tpu.memory_space<vmem>>, vector<16x256xf32>
    %32 = arith.mulf %31, %30 : vector<16x256xf32>
    %cst_16 = arith.constant dense<0.000000e+00> : vector<16xf32>
    %33 = vector.multi_reduction <add>, %32, %cst_16 [1] : vector<16x256xf32> to vector<16xf32>
    %34 = vector.shape_cast %33 : vector<16xf32> to vector<16x1xf32>
    %cst_17 = arith.constant 5.000000e-01 : f32
    %35 = vector.broadcast %cst_17 : f32 to vector<16x1xf32>
    %36 = arith.mulf %35, %34 : vector<16x1xf32>
    %37 = arith.addf %22, %36 : vector<16x1xf32>
    %38 = vector.shape_cast %37 : vector<16x1xf32> to vector<1x16xf32>
    %c0_18 = arith.constant 0 : index
    %c0_19 = arith.constant 0 : index
    %39 = vector.load %arg7[%c0_18, %c0_19] : memref<1x16xf32, #tpu.memory_space<vmem>>, vector<1x16xf32>
    tpu.vector_store %arg7[%c0_18, %c0_19], %38 {strides = array<i32>} : memref<1x16xf32, #tpu.memory_space<vmem>>, vector<1x16xf32>,
    return
  }
  func.func @transform_0(%arg0: i32) -> (i32, i32) {
    %c0_i32 = arith.constant 0 : i32
    %c0_i32_0 = arith.constant 0 : i32
    return %arg0, %c0_i32 : i32, i32
  }
  func.func @transform_1(%arg0: i32) -> (i32, i32) {
    %c0_i32 = arith.constant 0 : i32
    %c0_i32_0 = arith.constant 0 : i32
    return %arg0, %c0_i32 : i32, i32
  }
  func.func @transform_2(%arg0: i32) -> (i32, i32) {
    %c0_i32 = arith.constant 0 : i32
    %c0_i32_0 = arith.constant 0 : i32
    return %arg0, %c0_i32 : i32, i32
  }
  func.func @transform_3(%arg0: i32) -> (i32, i32) {
    %c0_i32 = arith.constant 0 : i32
    %c0_i32_0 = arith.constant 0 : i32
    %c0_i32_1 = arith.constant 0 : i32
    return %c0_i32, %c0_i32_0 : i32, i32
  }
  func.func @transform_4(%arg0: i32) -> (i32, i32) {
    %c0_i32 = arith.constant 0 : i32
    %c0_i32_0 = arith.constant 0 : i32
    %c0_i32_1 = arith.constant 0 : i32
    return %c0_i32, %c0_i32_0 : i32, i32
  }
  func.func @transform_5(%arg0: i32) -> (i32, i32) {
    %c0_i32 = arith.constant 0 : i32
    %c0_i32_0 = arith.constant 0 : i32
    %c0_i32_1 = arith.constant 0 : i32
    return %c0_i32, %c0_i32_0 : i32, i32
  }
  func.func @transform_6(%arg0: i32) -> (i32, i32) {
    %c0_i32 = arith.constant 0 : i32
    %c0_i32_0 = arith.constant 0 : i32
    return %arg0, %c0_i32 : i32, i32
  }
}

</mosaic_0001>

<llo_original>
// kernel: cov_quadratic_cross_entropy_loss.1
$region0: #{cov_quadratic_cross_entropy_loss.1}
  #allocation0 [shape = 'u32[]', space=smem, size = 0x4, offset = 0x4, fixed_abs, tag = 'smem constant byte address 0x4 - core index']
  #allocation1 [shape = 'u32[144,128]{1,0:T(1,128)}', space=vmem, size = 0x12000, scoped, tag = 'internal scratch']
  %s0 = inlined_call_operand.vmem [shape: s32[1,16], index: 0, kind: input, shape index: {}]
  %s1 = inlined_call_operand.vmem [shape: f32[16,16], index: 1, kind: input, shape index: {}]
  %s2 = inlined_call_operand.vmem [shape: f32[16,256], index: 2, kind: input, shape index: {}]
  %s3 = inlined_call_operand.vmem [shape: f32[1,256], index: 3, kind: input, shape index: {}]
  %s4 = inlined_call_operand.vmem [shape: f32[16,256], index: 4, kind: input, shape index: {}]
  %s5 = inlined_call_operand.vmem [shape: f32[16,256], index: 5, kind: input, shape index: {}]
  %s6 = inlined_call_operand.vmem [shape: f32[1,16], index: 6, kind: output, shape index: {}]
  %s7 = sld [smem:[#allocation0]]
  $region34: #{cov_quadratic_cross_entropy_loss.1} parent=0
    _
  %s9 = ssub.s32 1, %s7
  %s10 = scalar_select 0, %s9, %s7
  // Predicated region
  $region2: #{cov_quadratic_cross_entropy_loss.1} parent=0 // pred_check
    _
  $region3: #{cov_quadratic_cross_entropy_loss.1} parent=0 // pred_check_branch
    %12 = sbr.rel (0) target = $region5
  $region4: #{cov_quadratic_cross_entropy_loss.1} parent=0 // pred_region
    _
  $region5: #{cov_quadratic_cross_entropy_loss.1} parent=0 // pred_fallthru
    _
  // Predicated region
  $region6: #{cov_quadratic_cross_entropy_loss.1} parent=0 // pred_check
    _
  $region7: #{cov_quadratic_cross_entropy_loss.1} parent=0 // pred_check_branch
    %14 = sbr.rel (0) target = $region9
  $region8: #{cov_quadratic_cross_entropy_loss.1} parent=0 // pred_region
    _
  $region9: #{cov_quadratic_cross_entropy_loss.1} parent=0 // pred_fallthru
    _
  // Predicated region
  $region10: #{cov_quadratic_cross_entropy_loss.1} parent=0 // pred_check
    _
  $region11: #{cov_quadratic_cross_entropy_loss.1} parent=0 // pred_check_branch
    %16 = sbr.rel (0) target = $region13
  $region12: #{cov_quadratic_cross_entropy_loss.1} parent=0 // pred_region
    _
  $region13: #{cov_quadratic_cross_entropy_loss.1} parent=0 // pred_fallthru
    _
  // Predicated region
  $region14: #{cov_quadratic_cross_entropy_loss.1} parent=0 // pred_check
    _
  $region15: #{cov_quadratic_cross_entropy_loss.1} parent=0 // pred_check_branch
    %18 = sbr.rel (0) target = $region17
  $region16: #{cov_quadratic_cross_entropy_loss.1} parent=0 // pred_region
    _
  $region17: #{cov_quadratic_cross_entropy_loss.1} parent=0 // pred_fallthru
    _
  // Predicated region
  $region18: #{cov_quadratic_cross_entropy_loss.1} parent=0 // pred_check
    _
  $region19: #{cov_quadratic_cross_entropy_loss.1} parent=0 // pred_check_branch
    %20 = sbr.rel (0) target = $region21
  $region20: #{cov_quadratic_cross_entropy_loss.1} parent=0 // pred_region
    _
  $region21: #{cov_quadratic_cross_entropy_loss.1} parent=0 // pred_fallthru
    _
  // Predicated region
  $region22: #{cov_quadratic_cross_entropy_loss.1} parent=0 // pred_check
    _
  $region23: #{cov_quadratic_cross_entropy_loss.1} parent=0 // pred_check_branch
    %22 = sbr.rel (0) target = $region25
  $region24: #{cov_quadratic_cross_entropy_loss.1} parent=0 // pred_region
    _
  $region25: #{cov_quadratic_cross_entropy_loss.1} parent=0 // pred_fallthru
    _
  %v23 = vld [vmem:[%s1] sm:$0xff]
  %v24 = vld [vmem:[%s1 + $0x8] sm:$0xff]
  %v25 = vld [vmem:[%s0] sm:$0x1]
  %v26 = vlaneseq
  %v27 = vshrl.u32 %v26, 7
  %v28 = vsub.s32 0, %v27
  %v29 = vrot.slane %v25, %v28
  %31 = vbcast.lane.b32.xlu0 %v29, 256
  %v32 = vpop.permute.xlu0 %31
  %s34 = sor.u32 256, 8
  %35 = vbcast.lane.b32.xlu0 %v29, %s34
  %v36 = vpop.permute.xlu0 %35
  %vm37 = vcmask 130048
  %v38 = vsel %vm37, %v23, -inf
  %39 = vmax.xlane.f32.xlu0 %v38
  %v40 = vpop.xlane.xlu0 %39
  %v41 = vsel %vm37, %v24, -inf
  %42 = vmax.xlane.f32.xlu0 %v41
  %v43 = vpop.xlane.xlu0 %42
  %v44 = vsub.f32 %v23, %v40
  %v45 = vsub.f32 %v24, %v43
  %v46 = vmul.f32 %v44, 1.442695
  %v47 = vpow.pop %v46
  %v48 = vmul.f32 %v45, 1.442695
  %v49 = vpow.pop %v48
  %v50 = vsel %vm37, %v47, 0.0
  %51 = vadd.xlane.f32.xlu0 %v50
  %v52 = vpop.xlane.xlu0 %51
  %v53 = vsel %vm37, %v49, 0.0
  %54 = vadd.xlane.f32.xlu0 %v53
  %v55 = vpop.xlane.xlu0 %54
  %v56 = vlog2.pop %v52
  %v57 = vmul.f32 %v56, 0.6931472
  %v58 = vlog2.pop %v55
  %v59 = vmul.f32 %v58, 0.6931472
  %v60 = vadd.f32 %v40, %v57
  %v61 = vadd.f32 %v43, %v59
  %v62 = vrcp.pop %v52
  %v63 = vrcp.pop %v55
  %v64 = vmul.f32 %v47, %v62
  %v65 = vmul.f32 %v49, %v63
  %v66 = vlaneseq
  %v67 = vand.u32 %v66, 127
  %vm68 = vcmp.eq.s32.totalorder %v67, %v32
  %vm69 = vcmp.eq.s32.totalorder %v67, %v36
  %v70 = vsel %vm68, %v23, 0.0
  %v71 = vsel %vm69, %v24, 0.0
  %v72 = vsel %vm37, %v70, 0.0
  %73 = vadd.xlane.f32.xlu0 %v72
  %v74 = vpop.xlane.xlu0 %73
  %v75 = vsel %vm37, %v71, 0.0
  %76 = vadd.xlane.f32.xlu0 %v75
  %v77 = vpop.xlane.xlu0 %76
  %v78 = vsub.f32 %v60, %v74
  %v79 = vsub.f32 %v61, %v77
  %v80 = vld [vmem:[%s4] sm:$0xff]
  %v81 = vld [vmem:[%s4 + $0x8] sm:$0xff]
  %v82 = vld [vmem:[%s4 + $0x10] sm:$0xff]
  %v83 = vld [vmem:[%s4 + $0x18] sm:$0xff]
  %v85 = vsel %vm37, %v64, 0
  %v88 = vsel %vm37, %v65, 0
  %v90 = vand.u32 %v81, 4294901760
  %91 = vmatprep.subr.mxu0 %v90
  %v92 = vand.u32 %v80, 4294901760
  %93 = vmatpush1.msra.mxu0 %v92
  %v94 = vand.u32 %v83, 4294901760
  %95 = vmatprep.subr.mxu0 %v94
  %v96 = vand.u32 %v82, 4294901760
  %97 = vmatpush1.msra.mxu0 %v96
  %98 = vmatprep.subr.mxu0 0.0
  %99 = vmatpush1.msra.mxu0 0.0
  %100 = vmatprep.subr.mxu0 0.0
  %101 = vmatpush1.msra.mxu0 0.0
  %102 = vmatprep.subr.mxu0 0.0
  %103 = vmatpush1.msra.mxu0 0.0
  %104 = vmatprep.subr.mxu0 0.0
  %105 = vmatpush1.msra.mxu0 0.0
  %106 = vmatprep.subr.mxu0 0.0
  %107 = vmatpush1.msra.mxu0 0.0
  %108 = vmatprep.subr.mxu0 0.0
  %109 = vmatpush1.msra.mxu0 0.0
  %110 = vmatprep.subr.mxu0 0.0
  %111 = vmatpush1.msra.mxu0 0.0
  %112 = vmatprep.subr.mxu0 0.0
  %113 = vmatpush1.msra.mxu0 0.0
  %114 = vmatprep.subr.mxu0 0.0
  %115 = vmatpush1.msra.mxu0 0.0
  %116 = vmatprep.subr.mxu0 0.0
  %117 = vmatpush1.msra.mxu0 0.0
  %118 = vmatprep.subr.mxu0 0.0
  %119 = vmatpush1.msra.mxu0 0.0
  %120 = vmatprep.subr.mxu0 0.0
  %121 = vmatpush1.msra.mxu0 0.0
  %122 = vmatprep.subr.mxu0 0.0
  %123 = vmatpush1.msra.mxu0 0.0
  %124 = vmatprep.subr.mxu0 0.0
  %125 = vmatpush1.msra.mxu0 0.0
  %126 = vmatprep.subr.mxu0 0.0
  %127 = vmatpush1.msra.mxu0 0.0
  %128 = vmatprep.subr.mxu0 0.0
  %129 = vmatpush1.msra.mxu0 0.0
  %130 = vmatprep.subr.mxu0 0.0
  %131 = vmatpush1.msra.mxu0 0.0
  %132 = vmatprep.subr.mxu0 0.0
  %133 = vmatpush1.msra.mxu0 0.0
  %134 = vmatprep.subr.mxu0 0.0
  %135 = vmatpush1.msra.mxu0 0.0
  %136 = vmatprep.subr.mxu0 0.0
  %137 = vmatpush1.msra.mxu0 0.0
  %138 = vmatprep.subr.mxu0 0.0
  %139 = vmatpush1.msra.mxu0 0.0
  %140 = vmatprep.subr.mxu0 0.0
  %141 = vmatpush1.msra.mxu0 0.0
  %142 = vmatprep.subr.mxu0 0.0
  %143 = vmatpush1.msra.mxu0 0.0
  %144 = vmatprep.subr.mxu0 0.0
  %145 = vmatpush1.msra.mxu0 0.0
  %146 = vmatprep.subr.mxu0 0.0
  %147 = vmatpush1.msra.mxu0 0.0
  %148 = vmatprep.subr.mxu0 0.0
  %149 = vmatpush1.msra.mxu0 0.0
  %150 = vmatprep.subr.mxu0 0.0
  %151 = vmatpush1.msra.mxu0 0.0
  %152 = vmatprep.subr.mxu0 0.0
  %153 = vmatpush1.msra.mxu0 0.0
  %154 = vmatprep.subr.mxu0 0.0
  %155 = vmatpush1.msra.mxu0 0.0
  %156 = vmatprep.subr.mxu0 0.0
  %157 = vmatpush1.msra.mxu0 0.0
  %158 = vmatprep.mubr.f32.mxu0 0.0
  %v159 = vand.u32 %v85, 4294901760
  %v160 = vsub.f32 %v85, %v159
  %v161 = vand.u32 %v160, 4294901760
  %v162 = vsub.f32 %v160, %v161
  %v163 = vand.u32 %v162, 4294901760
  %164 = vmatmul.mubr.f32.gmra.mrb[0].mxu0 %v163
  %v165 = vpop.f32.mrb[0].mxu0
  %v166 = vadd.f32 0.0, %v165
  %v167 = vpop.f32.mrb[0].mxu0
  %v168 = vadd.f32 0.0, %v167
  %169 = vmatprep.mubr.f32.mxu0 0.0
  %v170 = vand.u32 %v88, 4294901760
  %v171 = vsub.f32 %v88, %v170
  %v172 = vand.u32 %v171, 4294901760
  %v173 = vsub.f32 %v171, %v172
  %v174 = vand.u32 %v173, 4294901760
  %175 = vmatmul.mubr.f32.gmra.mrb[0].mxu0 %v174
  %v176 = vpop.f32.mrb[0].mxu0
  %v177 = vadd.f32 0.0, %v176
  %v178 = vpop.f32.mrb[0].mxu0
  %v179 = vadd.f32 0.0, %v178
  %180 = vdwg.mxu0
  %v181 = vand.u32 %v81, 4294901760
  %v182 = vsub.f32 %v81, %v181
  %v183 = vand.u32 %v182, 4294901760
  %v184 = vsub.f32 %v182, %v183
  %v185 = vand.u32 %v184, 4294901760
  %186 = vmatprep.subr.mxu0 %v185
  %v187 = vand.u32 %v80, 4294901760
  %v188 = vsub.f32 %v80, %v187
  %v189 = vand.u32 %v188, 4294901760
  %v190 = vsub.f32 %v188, %v189
  %v191 = vand.u32 %v190, 4294901760
  %192 = vmatpush1.msra.mxu0 %v191
  %v193 = vand.u32 %v83, 4294901760
  %v194 = vsub.f32 %v83, %v193
  %v195 = vand.u32 %v194, 4294901760
  %v196 = vsub.f32 %v194, %v195
  %v197 = vand.u32 %v196, 4294901760
  %198 = vmatprep.subr.mxu0 %v197
  %v199 = vand.u32 %v82, 4294901760
  %v200 = vsub.f32 %v82, %v199
  %v201 = vand.u32 %v200, 4294901760
  %v202 = vsub.f32 %v200, %v201
  %v203 = vand.u32 %v202, 4294901760
  %204 = vmatpush1.msra.mxu0 %v203
  %205 = vmatprep.subr.mxu0 0.0
  %206 = vmatpush1.msra.mxu0 0.0
  %207 = vmatprep.subr.mxu0 0.0
  %208 = vmatpush1.msra.mxu0 0.0
  %209 = vmatprep.subr.mxu0 0.0
  %210 = vmatpush1.msra.mxu0 0.0
  %211 = vmatprep.subr.mxu0 0.0
  %212 = vmatpush1.msra.mxu0 0.0
  %213 = vmatprep.subr.mxu0 0.0
  %214 = vmatpush1.msra.mxu0 0.0
  %215 = vmatprep.subr.mxu0 0.0
  %216 = vmatpush1.msra.mxu0 0.0
  %217 = vmatprep.subr.mxu0 0.0
  %218 = vmatpush1.msra.mxu0 0.0
  %219 = vmatprep.subr.mxu0 0.0
  %220 = vmatpush1.msra.mxu0 0.0
  %221 = vmatprep.subr.mxu0 0.0
  %222 = vmatpush1.msra.mxu0 0.0
  %223 = vmatprep.subr.mxu0 0.0
  %224 = vmatpush1.msra.mxu0 0.0
  %225 = vmatprep.subr.mxu0 0.0
  %226 = vmatpush1.msra.mxu0 0.0
  %227 = vmatprep.subr.mxu0 0.0
  %228 = vmatpush1.msra.mxu0 0.0
  %229 = vmatprep.subr.mxu0 0.0
  %230 = vmatpush1.msra.mxu0 0.0
  %231 = vmatprep.subr.mxu0 0.0
  %232 = vmatpush1.msra.mxu0 0.0
  %233 = vmatprep.subr.mxu0 0.0
  %234 = vmatpush1.msra.mxu0 0.0
  %235 = vmatprep.subr.mxu0 0.0
  %236 = vmatpush1.msra.mxu0 0.0
  %237 = vmatprep.subr.mxu0 0.0
  %238 = vmatpush1.msra.mxu0 0.0
  %239 = vmatprep.subr.mxu0 0.0
  %240 = vmatpush1.msra.mxu0 0.0
  %241 = vmatprep.subr.mxu0 0.0
  %242 = vmatpush1.msra.mxu0 0.0
  %243 = vmatprep.subr.mxu0 0.0
  %244 = vmatpush1.msra.mxu0 0.0
  %245 = vmatprep.subr.mxu0 0.0
  %246 = vmatpush1.msra.mxu0 0.0
  %247 = vmatprep.subr.mxu0 0.0
  %248 = vmatpush1.msra.mxu0 0.0
  %249 = vmatprep.subr.mxu0 0.0
  %250 = vmatpush1.msra.mxu0 0.0
  %251 = vmatprep.subr.mxu0 0.0
  %252 = vmatpush1.msra.mxu0 0.0
  %253 = vmatprep.subr.mxu0 0.0
  %254 = vmatpush1.msra.mxu0 0.0
  %255 = vmatprep.subr.mxu0 0.0
  %256 = vmatpush1.msra.mxu0 0.0
  %257 = vmatprep.subr.mxu0 0.0
  %258 = vmatpush1.msra.mxu0 0.0
  %259 = vmatprep.subr.mxu0 0.0
  %260 = vmatpush1.msra.mxu0 0.0
  %261 = vmatprep.subr.mxu0 0.0
  %262 = vmatpush1.msra.mxu0 0.0
  %263 = vmatprep.subr.mxu0 0.0
  %264 = vmatpush1.msra.mxu0 0.0
  %265 = vmatprep.mubr.f32.mxu0 0.0
  %v266 = vand.u32 %v85, 4294901760
  %267 = vmatmul.mubr.f32.gmra.mrb[0].mxu0 %v266
  %v268 = vpop.f32.mrb[0].mxu0
  %v269 = vadd.f32 %v166, %v268
  %v270 = vpop.f32.mrb[0].mxu0
  %v271 = vadd.f32 %v168, %v270
  %272 = vmatprep.mubr.f32.mxu0 0.0
  %v273 = vand.u32 %v88, 4294901760
  %274 = vmatmul.mubr.f32.gmra.mrb[0].mxu0 %v273
  %v275 = vpop.f32.mrb[0].mxu0
  %v276 = vadd.f32 %v177, %v275
  %v277 = vpop.f32.mrb[0].mxu0
  %v278 = vadd.f32 %v179, %v277
  %279 = vdwg.mxu0
  %v280 = vand.u32 %v81, 4294901760
  %v281 = vsub.f32 %v81, %v280
  %282 = vmatprep.subr.mxu0 %v281
  %v283 = vand.u32 %v80, 4294901760
  %v284 = vsub.f32 %v80, %v283
  %285 = vmatpush1.msra.mxu0 %v284
  %v286 = vand.u32 %v83, 4294901760
  %v287 = vsub.f32 %v83, %v286
  %288 = vmatprep.subr.mxu0 %v287
  %v289 = vand.u32 %v82, 4294901760
  %v290 = vsub.f32 %v82, %v289
  %291 = vmatpush1.msra.mxu0 %v290
  %292 = vmatprep.subr.mxu0 0.0
  %293 = vmatpush1.msra.mxu0 0.0
  %294 = vmatprep.subr.mxu0 0.0
  %295 = vmatpush1.msra.mxu0 0.0
  %296 = vmatprep.subr.mxu0 0.0
  %297 = vmatpush1.msra.mxu0 0.0
  %298 = vmatprep.subr.mxu0 0.0
  %299 = vmatpush1.msra.mxu0 0.0
  %300 = vmatprep.subr.mxu0 0.0
  %301 = vmatpush1.msra.mxu0 0.0
  %302 = vmatprep.subr.mxu0 0.0
  %303 = vmatpush1.msra.mxu0 0.0
  %304 = vmatprep.subr.mxu0 0.0
  %305 = vmatpush1.msra.mxu0 0.0
  %306 = vmatprep.subr.mxu0 0.0
  %307 = vmatpush1.msra.mxu0 0.0
  %308 = vmatprep.subr.mxu0 0.0
  %309 = vmatpush1.msra.mxu0 0.0
  %310 = vmatprep.subr.mxu0 0.0
  %311 = vmatpush1.msra.mxu0 0.0
  %312 = vmatprep.subr.mxu0 0.0
  %313 = vmatpush1.msra.mxu0 0.0
  %314 = vmatprep.subr.mxu0 0.0
  %315 = vmatpush1.msra.mxu0 0.0
  %316 = vmatprep.subr.mxu0 0.0
  %317 = vmatpush1.msra.mxu0 0.0
  %318 = vmatprep.subr.mxu0 0.0
  %319 = vmatpush1.msra.mxu0 0.0
  %320 = vmatprep.subr.mxu0 0.0
  %321 = vmatpush1.msra.mxu0 0.0
  %322 = vmatprep.subr.mxu0 0.0
  %323 = vmatpush1.msra.mxu0 0.0
  %324 = vmatprep.subr.mxu0 0.0
  %325 = vmatpush1.msra.mxu0 0.0
  %326 = vmatprep.subr.mxu0 0.0
  %327 = vmatpush1.msra.mxu0 0.0
  %328 = vmatprep.subr.mxu0 0.0
  %329 = vmatpush1.msra.mxu0 0.0
  %330 = vmatprep.subr.mxu0 0.0
  %331 = vmatpush1.msra.mxu0 0.0
  %332 = vmatprep.subr.mxu0 0.0
  %333 = vmatpush1.msra.mxu0 0.0
  %334 = vmatprep.subr.mxu0 0.0
  %335 = vmatpush1.msra.mxu0 0.0
  %336 = vmatprep.subr.mxu0 0.0
  %337 = vmatpush1.msra.mxu0 0.0
  %338 = vmatprep.subr.mxu0 0.0
  %339 = vmatpush1.msra.mxu0 0.0
  %340 = vmatprep.subr.mxu0 0.0
  %341 = vmatpush1.msra.mxu0 0.0
  %342 = vmatprep.subr.mxu0 0.0
  %343 = vmatpush1.msra.mxu0 0.0
  %344 = vmatprep.subr.mxu0 0.0
  %345 = vmatpush1.msra.mxu0 0.0
  %346 = vmatprep.subr.mxu0 0.0
  %347 = vmatpush1.msra.mxu0 0.0
  %348 = vmatprep.subr.mxu0 0.0
  %349 = vmatpush1.msra.mxu0 0.0
  %350 = vmatprep.subr.mxu0 0.0
  %351 = vmatpush1.msra.mxu0 0.0
  %352 = vmatprep.mubr.f32.mxu0 0.0
  %v353 = vand.u32 %v85, 4294901760
  %v354 = vsub.f32 %v85, %v353
  %355 = vmatmul.mubr.f32.gmra.mrb[0].mxu0 %v354
  %v356 = vpop.f32.mrb[0].mxu0
  %v357 = vadd.f32 %v269, %v356
  %v358 = vpop.f32.mrb[0].mxu0
  %v359 = vadd.f32 %v271, %v358
  %360 = vmatprep.mubr.f32.mxu0 0.0
  %v361 = vand.u32 %v88, 4294901760
  %v362 = vsub.f32 %v88, %v361
  %363 = vmatmul.mubr.f32.gmra.mrb[0].mxu0 %v362
  %v364 = vpop.f32.mrb[0].mxu0
  %v365 = vadd.f32 %v276, %v364
  %v366 = vpop.f32.mrb[0].mxu0
  %v367 = vadd.f32 %v278, %v366
  %368 = vdwg.mxu0
  %v369 = vand.u32 %v81, 4294901760
  %370 = vmatprep.subr.mxu0 %v369
  %v371 = vand.u32 %v80, 4294901760
  %372 = vmatpush1.msra.mxu0 %v371
  %v373 = vand.u32 %v83, 4294901760
  %374 = vmatprep.subr.mxu0 %v373
  %v375 = vand.u32 %v82, 4294901760
  %376 = vmatpush1.msra.mxu0 %v375
  %377 = vmatprep.subr.mxu0 0.0
  %378 = vmatpush1.msra.mxu0 0.0
  %379 = vmatprep.subr.mxu0 0.0
  %380 = vmatpush1.msra.mxu0 0.0
  %381 = vmatprep.subr.mxu0 0.0
  %382 = vmatpush1.msra.mxu0 0.0
  %383 = vmatprep.subr.mxu0 0.0
  %384 = vmatpush1.msra.mxu0 0.0
  %385 = vmatprep.subr.mxu0 0.0
  %386 = vmatpush1.msra.mxu0 0.0
  %387 = vmatprep.subr.mxu0 0.0
  %388 = vmatpush1.msra.mxu0 0.0
  %389 = vmatprep.subr.mxu0 0.0
  %390 = vmatpush1.msra.mxu0 0.0
  %391 = vmatprep.subr.mxu0 0.0
  %392 = vmatpush1.msra.mxu0 0.0
  %393 = vmatprep.subr.mxu0 0.0
  %394 = vmatpush1.msra.mxu0 0.0
  %395 = vmatprep.subr.mxu0 0.0
  %396 = vmatpush1.msra.mxu0 0.0
  %397 = vmatprep.subr.mxu0 0.0
  %398 = vmatpush1.msra.mxu0 0.0
  %399 = vmatprep.subr.mxu0 0.0
  %400 = vmatpush1.msra.mxu0 0.0
  %401 = vmatprep.subr.mxu0 0.0
  %402 = vmatpush1.msra.mxu0 0.0
  %403 = vmatprep.subr.mxu0 0.0
  %404 = vmatpush1.msra.mxu0 0.0
  %405 = vmatprep.subr.mxu0 0.0
  %406 = vmatpush1.msra.mxu0 0.0
  %407 = vmatprep.subr.mxu0 0.0
  %408 = vmatpush1.msra.mxu0 0.0
  %409 = vmatprep.subr.mxu0 0.0
  %410 = vmatpush1.msra.mxu0 0.0
  %411 = vmatprep.subr.mxu0 0.0
  %412 = vmatpush1.msra.mxu0 0.0
  %413 = vmatprep.subr.mxu0 0.0
  %414 = vmatpush1.msra.mxu0 0.0
  %415 = vmatprep.subr.mxu0 0.0
  %416 = vmatpush1.msra.mxu0 0.0
  %417 = vmatprep.subr.mxu0 0.0
  %418 = vmatpush1.msra.mxu0 0.0
  %419 = vmatprep.subr.mxu0 0.0
  %420 = vmatpush1.msra.mxu0 0.0
  %421 = vmatprep.subr.mxu0 0.0
  %422 = vmatpush1.msra.mxu0 0.0
  %423 = vmatprep.subr.mxu0 0.0
  %424 = vmatpush1.msra.mxu0 0.0
  %425 = vmatprep.subr.mxu0 0.0
  %426 = vmatpush1.msra.mxu0 0.0
  %427 = vmatprep.subr.mxu0 0.0
  %428 = vmatpush1.msra.mxu0 0.0
  %429 = vmatprep.subr.mxu0 0.0
  %430 = vmatpush1.msra.mxu0 0.0
  %431 = vmatprep.subr.mxu0 0.0
  %432 = vmatpush1.msra.mxu0 0.0
  %433 = vmatprep.subr.mxu0 0.0
  %434 = vmatpush1.msra.mxu0 0.0
  %435 = vmatprep.subr.mxu0 0.0
  %436 = vmatpush1.msra.mxu0 0.0
  %437 = vmatprep.mubr.f32.mxu0 0.0
  %v438 = vand.u32 %v85, 4294901760
  %v439 = vsub.f32 %v85, %v438
  %v440 = vand.u32 %v439, 4294901760
  %441 = vmatmul.mubr.f32.gmra.mrb[0].mxu0 %v440
  %v442 = vpop.f32.mrb[0].mxu0
  %v443 = vadd.f32 %v357, %v442
  %v444 = vpop.f32.mrb[0].mxu0
  %v445 = vadd.f32 %v359, %v444
  %446 = vmatprep.mubr.f32.mxu0 0.0
  %v447 = vand.u32 %v88, 4294901760
  %v448 = vsub.f32 %v88, %v447
  %v449 = vand.u32 %v448, 4294901760
  %450 = vmatmul.mubr.f32.gmra.mrb[0].mxu0 %v449
  %v451 = vpop.f32.mrb[0].mxu0
  %v452 = vadd.f32 %v365, %v451
  %v453 = vpop.f32.mrb[0].mxu0
  %v454 = vadd.f32 %v367, %v453
  %455 = vdwg.mxu0
  %v456 = vand.u32 %v81, 4294901760
  %v457 = vsub.f32 %v81, %v456
  %v458 = vand.u32 %v457, 4294901760
  %459 = vmatprep.subr.mxu0 %v458
  %v460 = vand.u32 %v80, 4294901760
  %v461 = vsub.f32 %v80, %v460
  %v462 = vand.u32 %v461, 4294901760
  %463 = vmatpush1.msra.mxu0 %v462
  %v464 = vand.u32 %v83, 4294901760
  %v465 = vsub.f32 %v83, %v464
  %v466 = vand.u32 %v465, 4294901760
  %467 = vmatprep.subr.mxu0 %v466
  %v468 = vand.u32 %v82, 4294901760
  %v469 = vsub.f32 %v82, %v468
  %v470 = vand.u32 %v469, 4294901760
  %471 = vmatpush1.msra.mxu0 %v470
  %472 = vmatprep.subr.mxu0 0.0
  %473 = vmatpush1.msra.mxu0 0.0
  %474 = vmatprep.subr.mxu0 0.0
  %475 = vmatpush1.msra.mxu0 0.0
  %476 = vmatprep.subr.mxu0 0.0
  %477 = vmatpush1.msra.mxu0 0.0
  %478 = vmatprep.subr.mxu0 0.0
  %479 = vmatpush1.msra.mxu0 0.0
  %480 = vmatprep.subr.mxu0 0.0
  %481 = vmatpush1.msra.mxu0 0.0
  %482 = vmatprep.subr.mxu0 0.0
  %483 = vmatpush1.msra.mxu0 0.0
  %484 = vmatprep.subr.mxu0 0.0
  %485 = vmatpush1.msra.mxu0 0.0
  %486 = vmatprep.subr.mxu0 0.0
  %487 = vmatpush1.msra.mxu0 0.0
  %488 = vmatprep.subr.mxu0 0.0
  %489 = vmatpush1.msra.mxu0 0.0
  %490 = vmatprep.subr.mxu0 0.0
  %491 = vmatpush1.msra.mxu0 0.0
  %492 = vmatprep.subr.mxu0 0.0
  %493 = vmatpush1.msra.mxu0 0.0
  %494 = vmatprep.subr.mxu0 0.0
  %495 = vmatpush1.msra.mxu0 0.0
  %496 = vmatprep.subr.mxu0 0.0
  %497 = vmatpush1.msra.mxu0 0.0
  %498 = vmatprep.subr.mxu0 0.0
  %499 = vmatpush1.msra.mxu0 0.0
  %500 = vmatprep.subr.mxu0 0.0
  %501 = vmatpush1.msra.mxu0 0.0
  %502 = vmatprep.subr.mxu0 0.0
  %503 = vmatpush1.msra.mxu0 0.0
  %504 = vmatprep.subr.mxu0 0.0
  %505 = vmatpush1.msra.mxu0 0.0
  %506 = vmatprep.subr.mxu0 0.0
  %507 = vmatpush1.msra.mxu0 0.0
  %508 = vmatprep.subr.mxu0 0.0
  %509 = vmatpush1.msra.mxu0 0.0
  %510 = vmatprep.subr.mxu0 0.0
  %511 = vmatpush1.msra.mxu0 0.0
  %512 = vmatprep.subr.mxu0 0.0
  %513 = vmatpush1.msra.mxu0 0.0
  %514 = vmatprep.subr.mxu0 0.0
  %515 = vmatpush1.msra.mxu0 0.0
  %516 = vmatprep.subr.mxu0 0.0
  %517 = vmatpush1.msra.mxu0 0.0
  %518 = vmatprep.subr.mxu0 0.0
  %519 = vmatpush1.msra.mxu0 0.0
  %520 = vmatprep.subr.mxu0 0.0
  %521 = vmatpush1.msra.mxu0 0.0
  %522 = vmatprep.subr.mxu0 0.0
  %523 = vmatpush1.msra.mxu0 0.0
  %524 = vmatprep.subr.mxu0 0.0
  %525 = vmatpush1.msra.mxu0 0.0
  %526 = vmatprep.subr.mxu0 0.0
  %527 = vmatpush1.msra.mxu0 0.0
  %528 = vmatprep.subr.mxu0 0.0
  %529 = vmatpush1.msra.mxu0 0.0
  %530 = vmatprep.subr.mxu0 0.0
  %531 = vmatpush1.msra.mxu0 0.0
  %532 = vmatprep.mubr.f32.mxu0 0.0
  %v533 = vand.u32 %v85, 4294901760
  %534 = vmatmul.mubr.f32.gmra.mrb[0].mxu0 %v533
  %v535 = vpop.f32.mrb[0].mxu0
  %v536 = vadd.f32 %v443, %v535
  %v537 = vpop.f32.mrb[0].mxu0
  %v538 = vadd.f32 %v445, %v537
  %539 = vmatprep.mubr.f32.mxu0 0.0
  %v540 = vand.u32 %v88, 4294901760
  %541 = vmatmul.mubr.f32.gmra.mrb[0].mxu0 %v540
  %v542 = vpop.f32.mrb[0].mxu0
  %v543 = vadd.f32 %v452, %v542
  %v544 = vpop.f32.mrb[0].mxu0
  %v545 = vadd.f32 %v454, %v544
  %546 = vdwg.mxu0
  %v547 = vand.u32 %v81, 4294901760
  %548 = vmatprep.subr.mxu0 %v547
  %v549 = vand.u32 %v80, 4294901760
  %550 = vmatpush1.msra.mxu0 %v549
  %v551 = vand.u32 %v83, 4294901760
  %552 = vmatprep.subr.mxu0 %v551
  %v553 = vand.u32 %v82, 4294901760
  %554 = vmatpush1.msra.mxu0 %v553
  %555 = vmatprep.subr.mxu0 0.0
  %556 = vmatpush1.msra.mxu0 0.0
  %557 = vmatprep.subr.mxu0 0.0
  %558 = vmatpush1.msra.mxu0 0.0
  %559 = vmatprep.subr.mxu0 0.0
  %560 = vmatpush1.msra.mxu0 0.0
  %561 = vmatprep.subr.mxu0 0.0
  %562 = vmatpush1.msra.mxu0 0.0
  %563 = vmatprep.subr.mxu0 0.0
  %564 = vmatpush1.msra.mxu0 0.0
  %565 = vmatprep.subr.mxu0 0.0
  %566 = vmatpush1.msra.mxu0 0.0
  %567 = vmatprep.subr.mxu0 0.0
  %568 = vmatpush1.msra.mxu0 0.0
  %569 = vmatprep.subr.mxu0 0.0
  %570 = vmatpush1.msra.mxu0 0.0
  %571 = vmatprep.subr.mxu0 0.0
  %572 = vmatpush1.msra.mxu0 0.0
  %573 = vmatprep.subr.mxu0 0.0
  %574 = vmatpush1.msra.mxu0 0.0
  %575 = vmatprep.subr.mxu0 0.0
  %576 = vmatpush1.msra.mxu0 0.0
  %577 = vmatprep.subr.mxu0 0.0
  %578 = vmatpush1.msra.mxu0 0.0
  %579 = vmatprep.subr.mxu0 0.0
  %580 = vmatpush1.msra.mxu0 0.0
  %581 = vmatprep.subr.mxu0 0.0
  %582 = vmatpush1.msra.mxu0 0.0
  %583 = vmatprep.subr.mxu0 0.0
  %584 = vmatpush1.msra.mxu0 0.0
  %585 = vmatprep.subr.mxu0 0.0
  %586 = vmatpush1.msra.mxu0 0.0
  %587 = vmatprep.subr.mxu0 0.0
  %588 = vmatpush1.msra.mxu0 0.0
  %589 = vmatprep.subr.mxu0 0.0
  %590 = vmatpush1.msra.mxu0 0.0
  %591 = vmatprep.subr.mxu0 0.0
  %592 = vmatpush1.msra.mxu0 0.0
  %593 = vmatprep.subr.mxu0 0.0
  %594 = vmatpush1.msra.mxu0 0.0
  %595 = vmatprep.subr.mxu0 0.0
  %596 = vmatpush1.msra.mxu0 0.0
  %597 = vmatprep.subr.mxu0 0.0
  %598 = vmatpush1.msra.mxu0 0.0
  %599 = vmatprep.subr.mxu0 0.0
  %600 = vmatpush1.msra.mxu0 0.0
  %601 = vmatprep.subr.mxu0 0.0
  %602 = vmatpush1.msra.mxu0 0.0
  %603 = vmatprep.subr.mxu0 0.0
  %604 = vmatpush1.msra.mxu0 0.0
  %605 = vmatprep.subr.mxu0 0.0
  %606 = vmatpush1.msra.mxu0 0.0
  %607 = vmatprep.subr.mxu0 0.0
  %608 = vmatpush1.msra.mxu0 0.0
  %609 = vmatprep.subr.mxu0 0.0
  %610 = vmatpush1.msra.mxu0 0.0
  %611 = vmatprep.subr.mxu0 0.0
  %612 = vmatpush1.msra.mxu0 0.0
  %613 = vmatprep.subr.mxu0 0.0
  %614 = vmatpush1.msra.mxu0 0.0
  %615 = vmatprep.mubr.f32.mxu0 0.0
  %v616 = vand.u32 %v85, 4294901760
  %617 = vmatmul.mubr.f32.gmra.mrb[0].mxu0 %v616
  %v618 = vpop.f32.mrb[0].mxu0
  %v619 = vadd.f32 %v536, %v618
  %v620 = vpop.f32.mrb[0].mxu0
  %v621 = vadd.f32 %v538, %v620
  %622 = vmatprep.mubr.f32.mxu0 0.0
  %v623 = vand.u32 %v88, 4294901760
  %624 = vmatmul.mubr.f32.gmra.mrb[0].mxu0 %v623
  %v625 = vpop.f32.mrb[0].mxu0
  %v626 = vadd.f32 %v543, %v625
  %v627 = vpop.f32.mrb[0].mxu0
  %v628 = vadd.f32 %v545, %v627
  %629 = vdwg.mxu0
  %v630 = vld [vmem:[%s5] sm:$0xff]
  %v631 = vld [vmem:[%s5 + $0x8] sm:$0xff]
  %v632 = vld [vmem:[%s5 + $0x10] sm:$0xff]
  %v633 = vld [vmem:[%s5 + $0x18] sm:$0xff]
  %v634 = vand.u32 %v631, 4294901760
  %635 = vmatprep.subr.mxu0 %v634
  %v636 = vand.u32 %v630, 4294901760
  %637 = vmatpush1.msra.mxu0 %v636
  %v638 = vand.u32 %v633, 4294901760
  %639 = vmatprep.subr.mxu0 %v638
  %v640 = vand.u32 %v632, 4294901760
  %641 = vmatpush1.msra.mxu0 %v640
  %642 = vmatprep.subr.mxu0 0.0
  %643 = vmatpush1.msra.mxu0 0.0
  %644 = vmatprep.subr.mxu0 0.0
  %645 = vmatpush1.msra.mxu0 0.0
  %646 = vmatprep.subr.mxu0 0.0
  %647 = vmatpush1.msra.mxu0 0.0
  %648 = vmatprep.subr.mxu0 0.0
  %649 = vmatpush1.msra.mxu0 0.0
  %650 = vmatprep.subr.mxu0 0.0
  %651 = vmatpush1.msra.mxu0 0.0
  %652 = vmatprep.subr.mxu0 0.0
  %653 = vmatpush1.msra.mxu0 0.0
  %654 = vmatprep.subr.mxu0 0.0
  %655 = vmatpush1.msra.mxu0 0.0
  %656 = vmatprep.subr.mxu0 0.0
  %657 = vmatpush1.msra.mxu0 0.0
  %658 = vmatprep.subr.mxu0 0.0
  %659 = vmatpush1.msra.mxu0 0.0
  %660 = vmatprep.subr.mxu0 0.0
  %661 = vmatpush1.msra.mxu0 0.0
  %662 = vmatprep.subr.mxu0 0.0
  %663 = vmatpush1.msra.mxu0 0.0
  %664 = vmatprep.subr.mxu0 0.0
  %665 = vmatpush1.msra.mxu0 0.0
  %666 = vmatprep.subr.mxu0 0.0
  %667 = vmatpush1.msra.mxu0 0.0
  %668 = vmatprep.subr.mxu0 0.0
  %669 = vmatpush1.msra.mxu0 0.0
  %670 = vmatprep.subr.mxu0 0.0
  %671 = vmatpush1.msra.mxu0 0.0
  %672 = vmatprep.subr.mxu0 0.0
  %673 = vmatpush1.msra.mxu0 0.0
  %674 = vmatprep.subr.mxu0 0.0
  %675 = vmatpush1.msra.mxu0 0.0
  %676 = vmatprep.subr.mxu0 0.0
  %677 = vmatpush1.msra.mxu0 0.0
  %678 = vmatprep.subr.mxu0 0.0
  %679 = vmatpush1.msra.mxu0 0.0
  %680 = vmatprep.subr.mxu0 0.0
  %681 = vmatpush1.msra.mxu0 0.0
  %682 = vmatprep.subr.mxu0 0.0
  %683 = vmatpush1.msra.mxu0 0.0
  %684 = vmatprep.subr.mxu0 0.0
  %685 = vmatpush1.msra.mxu0 0.0
  %686 = vmatprep.subr.mxu0 0.0
  %687 = vmatpush1.msra.mxu0 0.0
  %688 = vmatprep.subr.mxu0 0.0
  %689 = vmatpush1.msra.mxu0 0.0
  %690 = vmatprep.subr.mxu0 0.0
  %691 = vmatpush1.msra.mxu0 0.0
  %692 = vmatprep.subr.mxu0 0.0
  %693 = vmatpush1.msra.mxu0 0.0
  %694 = vmatprep.subr.mxu0 0.0
  %695 = vmatpush1.msra.mxu0 0.0
  %696 = vmatprep.subr.mxu0 0.0
  %697 = vmatpush1.msra.mxu0 0.0
  %698 = vmatprep.subr.mxu0 0.0
  %699 = vmatpush1.msra.mxu0 0.0
  %700 = vmatprep.subr.mxu0 0.0
  %701 = vmatpush1.msra.mxu0 0.0
  %702 = vmatprep.mubr.f32.mxu0 0.0
  %v703 = vand.u32 %v85, 4294901760
  %v704 = vsub.f32 %v85, %v703
  %v705 = vand.u32 %v704, 4294901760
  %v706 = vsub.f32 %v704, %v705
  %v707 = vand.u32 %v706, 4294901760
  %708 = vmatmul.mubr.f32.gmra.mrb[0].mxu0 %v707
  %v709 = vpop.f32.mrb[0].mxu0
  %v710 = vadd.f32 0.0, %v709
  %v711 = vpop.f32.mrb[0].mxu0
  %v712 = vadd.f32 0.0, %v711
  %713 = vmatprep.mubr.f32.mxu0 0.0
  %v714 = vand.u32 %v88, 4294901760
  %v715 = vsub.f32 %v88, %v714
  %v716 = vand.u32 %v715, 4294901760
  %v717 = vsub.f32 %v715, %v716
  %v718 = vand.u32 %v717, 4294901760
  %719 = vmatmul.mubr.f32.gmra.mrb[0].mxu0 %v718
  %v720 = vpop.f32.mrb[0].mxu0
  %v721 = vadd.f32 0.0, %v720
  %v722 = vpop.f32.mrb[0].mxu0
  %v723 = vadd.f32 0.0, %v722
  %724 = vdwg.mxu0
  %v725 = vand.u32 %v631, 4294901760
  %v726 = vsub.f32 %v631, %v725
  %v727 = vand.u32 %v726, 4294901760
  %v728 = vsub.f32 %v726, %v727
  %v729 = vand.u32 %v728, 4294901760
  %730 = vmatprep.subr.mxu0 %v729
  %v731 = vand.u32 %v630, 4294901760
  %v732 = vsub.f32 %v630, %v731
  %v733 = vand.u32 %v732, 4294901760
  %v734 = vsub.f32 %v732, %v733
  %v735 = vand.u32 %v734, 4294901760
  %736 = vmatpush1.msra.mxu0 %v735
  %v737 = vand.u32 %v633, 4294901760
  %v738 = vsub.f32 %v633, %v737
  %v739 = vand.u32 %v738, 4294901760
  %v740 = vsub.f32 %v738, %v739
  %v741 = vand.u32 %v740, 4294901760
  %742 = vmatprep.subr.mxu0 %v741
  %v743 = vand.u32 %v632, 4294901760
  %v744 = vsub.f32 %v632, %v743
  %v745 = vand.u32 %v744, 4294901760
  %v746 = vsub.f32 %v744, %v745
  %v747 = vand.u32 %v746, 4294901760
  %748 = vmatpush1.msra.mxu0 %v747
  %749 = vmatprep.subr.mxu0 0.0
  %750 = vmatpush1.msra.mxu0 0.0
  %751 = vmatprep.subr.mxu0 0.0
  %752 = vmatpush1.msra.mxu0 0.0
  %753 = vmatprep.subr.mxu0 0.0
  %754 = vmatpush1.msra.mxu0 0.0
  %755 = vmatprep.subr.mxu0 0.0
  %756 = vmatpush1.msra.mxu0 0.0
  %757 = vmatprep.subr.mxu0 0.0
  %758 = vmatpush1.msra.mxu0 0.0
  %759 = vmatprep.subr.mxu0 0.0
  %760 = vmatpush1.msra.mxu0 0.0
  %761 = vmatprep.subr.mxu0 0.0
  %762 = vmatpush1.msra.mxu0 0.0
  %763 = vmatprep.subr.mxu0 0.0
  %764 = vmatpush1.msra.mxu0 0.0
  %765 = vmatprep.subr.mxu0 0.0
  %766 = vmatpush1.msra.mxu0 0.0
  %767 = vmatprep.subr.mxu0 0.0
  %768 = vmatpush1.msra.mxu0 0.0
  %769 = vmatprep.subr.mxu0 0.0
  %770 = vmatpush1.msra.mxu0 0.0
  %771 = vmatprep.subr.mxu0 0.0
  %772 = vmatpush1.msra.mxu0 0.0
  %773 = vmatprep.subr.mxu0 0.0
  %774 = vmatpush1.msra.mxu0 0.0
  %775 = vmatprep.subr.mxu0 0.0
  %776 = vmatpush1.msra.mxu0 0.0
  %777 = vmatprep.subr.mxu0 0.0
  %778 = vmatpush1.msra.mxu0 0.0
  %779 = vmatprep.subr.mxu0 0.0
  %780 = vmatpush1.msra.mxu0 0.0
  %781 = vmatprep.subr.mxu0 0.0
  %782 = vmatpush1.msra.mxu0 0.0
  %783 = vmatprep.subr.mxu0 0.0
  %784 = vmatpush1.msra.mxu0 0.0
  %785 = vmatprep.subr.mxu0 0.0
  %786 = vmatpush1.msra.mxu0 0.0
  %787 = vmatprep.subr.mxu0 0.0
  %788 = vmatpush1.msra.mxu0 0.0
  %789 = vmatprep.subr.mxu0 0.0
  %790 = vmatpush1.msra.mxu0 0.0
  %791 = vmatprep.subr.mxu0 0.0
  %792 = vmatpush1.msra.mxu0 0.0
  %793 = vmatprep.subr.mxu0 0.0
  %794 = vmatpush1.msra.mxu0 0.0
  %795 = vmatprep.subr.mxu0 0.0
  %796 = vmatpush1.msra.mxu0 0.0
  %797 = vmatprep.subr.mxu0 0.0
  %798 = vmatpush1.msra.mxu0 0.0
  %799 = vmatprep.subr.mxu0 0.0
  %800 = vmatpush1.msra.mxu0 0.0
  %801 = vmatprep.subr.mxu0 0.0
  %802 = vmatpush1.msra.mxu0 0.0
  %803 = vmatprep.subr.mxu0 0.0
  %804 = vmatpush1.msra.mxu0 0.0
  %805 = vmatprep.subr.mxu0 0.0
  %806 = vmatpush1.msra.mxu0 0.0
  %807 = vmatprep.subr.mxu0 0.0
  %808 = vmatpush1.msra.mxu0 0.0
  %809 = vmatprep.mubr.f32.mxu0 0.0
  %v810 = vand.u32 %v85, 4294901760
  %811 = vmatmul.mubr.f32.gmra.mrb[0].mxu0 %v810
  %v812 = vpop.f32.mrb[0].mxu0
  %v813 = vadd.f32 %v710, %v812
  %v814 = vpop.f32.mrb[0].mxu0
  %v815 = vadd.f32 %v712, %v814
  %816 = vmatprep.mubr.f32.mxu0 0.0
  %v817 = vand.u32 %v88, 4294901760
  %818 = vmatmul.mubr.f32.gmra.mrb[0].mxu0 %v817
  %v819 = vpop.f32.mrb[0].mxu0
  %v820 = vadd.f32 %v721, %v819
  %v821 = vpop.f32.mrb[0].mxu0
  %v822 = vadd.f32 %v723, %v821
  %823 = vdwg.mxu0
  %v824 = vand.u32 %v631, 4294901760
  %v825 = vsub.f32 %v631, %v824
  %826 = vmatprep.subr.mxu0 %v825
  %v827 = vand.u32 %v630, 4294901760
  %v828 = vsub.f32 %v630, %v827
  %829 = vmatpush1.msra.mxu0 %v828
  %v830 = vand.u32 %v633, 4294901760
  %v831 = vsub.f32 %v633, %v830
  %832 = vmatprep.subr.mxu0 %v831
  %v833 = vand.u32 %v632, 4294901760
  %v834 = vsub.f32 %v632, %v833
  %835 = vmatpush1.msra.mxu0 %v834
  %836 = vmatprep.subr.mxu0 0.0
  %837 = vmatpush1.msra.mxu0 0.0
  %838 = vmatprep.subr.mxu0 0.0
  %839 = vmatpush1.msra.mxu0 0.0
  %840 = vmatprep.subr.mxu0 0.0
  %841 = vmatpush1.msra.mxu0 0.0
  %842 = vmatprep.subr.mxu0 0.0
  %843 = vmatpush1.msra.mxu0 0.0
  %844 = vmatprep.subr.mxu0 0.0
  %845 = vmatpush1.msra.mxu0 0.0
  %846 = vmatprep.subr.mxu0 0.0
  %847 = vmatpush1.msra.mxu0 0.0
  %848 = vmatprep.subr.mxu0 0.0
  %849 = vmatpush1.msra.mxu0 0.0
  %850 = vmatprep.subr.mxu0 0.0
  %851 = vmatpush1.msra.mxu0 0.0
  %852 = vmatprep.subr.mxu0 0.0
  %853 = vmatpush1.msra.mxu0 0.0
  %854 = vmatprep.subr.mxu0 0.0
  %855 = vmatpush1.msra.mxu0 0.0
  %856 = vmatprep.subr.mxu0 0.0
  %857 = vmatpush1.msra.mxu0 0.0
  %858 = vmatprep.subr.mxu0 0.0
  %859 = vmatpush1.msra.mxu0 0.0
  %860 = vmatprep.subr.mxu0 0.0
  %861 = vmatpush1.msra.mxu0 0.0
  %862 = vmatprep.subr.mxu0 0.0
  %863 = vmatpush1.msra.mxu0 0.0
  %864 = vmatprep.subr.mxu0 0.0
  %865 = vmatpush1.msra.mxu0 0.0
  %866 = vmatprep.subr.mxu0 0.0
  %867 = vmatpush1.msra.mxu0 0.0
  %868 = vmatprep.subr.mxu0 0.0
  %869 = vmatpush1.msra.mxu0 0.0
  %870 = vmatprep.subr.mxu0 0.0
  %871 = vmatpush1.msra.mxu0 0.0
  %872 = vmatprep.subr.mxu0 0.0
  %873 = vmatpush1.msra.mxu0 0.0
  %874 = vmatprep.subr.mxu0 0.0
  %875 = vmatpush1.msra.mxu0 0.0
  %876 = vmatprep.subr.mxu0 0.0
  %877 = vmatpush1.msra.mxu0 0.0
  %878 = vmatprep.subr.mxu0 0.0
  %879 = vmatpush1.msra.mxu0 0.0
  %880 = vmatprep.subr.mxu0 0.0
  %881 = vmatpush1.msra.mxu0 0.0
  %882 = vmatprep.subr.mxu0 0.0
  %883 = vmatpush1.msra.mxu0 0.0
  %884 = vmatprep.subr.mxu0 0.0
  %885 = vmatpush1.msra.mxu0 0.0
  %886 = vmatprep.subr.mxu0 0.0
  %887 = vmatpush1.msra.mxu0 0.0
  %888 = vmatprep.subr.mxu0 0.0
  %889 = vmatpush1.msra.mxu0 0.0
  %890 = vmatprep.subr.mxu0 0.0
  %891 = vmatpush1.msra.mxu0 0.0
  %892 = vmatprep.subr.mxu0 0.0
  %893 = vmatpush1.msra.mxu0 0.0
  %894 = vmatprep.subr.mxu0 0.0
  %895 = vmatpush1.msra.mxu0 0.0
  %896 = vmatprep.mubr.f32.mxu0 0.0
  %v897 = vand.u32 %v85, 4294901760
  %v898 = vsub.f32 %v85, %v897
  %899 = vmatmul.mubr.f32.gmra.mrb[0].mxu0 %v898
  %v900 = vpop.f32.mrb[0].mxu0
  %v901 = vadd.f32 %v813, %v900
  %v902 = vpop.f32.mrb[0].mxu0
  %v903 = vadd.f32 %v815, %v902
  %904 = vmatprep.mubr.f32.mxu0 0.0
  %v905 = vand.u32 %v88, 4294901760
  %v906 = vsub.f32 %v88, %v905
  %907 = vmatmul.mubr.f32.gmra.mrb[0].mxu0 %v906
  %v908 = vpop.f32.mrb[0].mxu0
  %v909 = vadd.f32 %v820, %v908
  %v910 = vpop.f32.mrb[0].mxu0
  %v911 = vadd.f32 %v822, %v910
  %912 = vdwg.mxu0
  %v913 = vand.u32 %v631, 4294901760
  %914 = vmatprep.subr.mxu0 %v913
  %v915 = vand.u32 %v630, 4294901760
  %916 = vmatpush1.msra.mxu0 %v915
  %v917 = vand.u32 %v633, 4294901760
  %918 = vmatprep.subr.mxu0 %v917
  %v919 = vand.u32 %v632, 4294901760
  %920 = vmatpush1.msra.mxu0 %v919
  %921 = vmatprep.subr.mxu0 0.0
  %922 = vmatpush1.msra.mxu0 0.0
  %923 = vmatprep.subr.mxu0 0.0
  %924 = vmatpush1.msra.mxu0 0.0
  %925 = vmatprep.subr.mxu0 0.0
  %926 = vmatpush1.msra.mxu0 0.0
  %927 = vmatprep.subr.mxu0 0.0
  %928 = vmatpush1.msra.mxu0 0.0
  %929 = vmatprep.subr.mxu0 0.0
  %930 = vmatpush1.msra.mxu0 0.0
  %931 = vmatprep.subr.mxu0 0.0
  %932 = vmatpush1.msra.mxu0 0.0
  %933 = vmatprep.subr.mxu0 0.0
  %934 = vmatpush1.msra.mxu0 0.0
  %935 = vmatprep.subr.mxu0 0.0
  %936 = vmatpush1.msra.mxu0 0.0
  %937 = vmatprep.subr.mxu0 0.0
  %938 = vmatpush1.msra.mxu0 0.0
  %939 = vmatprep.subr.mxu0 0.0
  %940 = vmatpush1.msra.mxu0 0.0
  %941 = vmatprep.subr.mxu0 0.0
  %942 = vmatpush1.msra.mxu0 0.0
  %943 = vmatprep.subr.mxu0 0.0
  %944 = vmatpush1.msra.mxu0 0.0
  %945 = vmatprep.subr.mxu0 0.0
  %946 = vmatpush1.msra.mxu0 0.0
  %947 = vmatprep.subr.mxu0 0.0
  %948 = vmatpush1.msra.mxu0 0.0
  %949 = vmatprep.subr.mxu0 0.0
  %950 = vmatpush1.msra.mxu0 0.0
  %951 = vmatprep.subr.mxu0 0.0
  %952 = vmatpush1.msra.mxu0 0.0
  %953 = vmatprep.subr.mxu0 0.0
  %954 = vmatpush1.msra.mxu0 0.0
  %955 = vmatprep.subr.mxu0 0.0
  %956 = vmatpush1.msra.mxu0 0.0
  %957 = vmatprep.subr.mxu0 0.0
  %958 = vmatpush1.msra.mxu0 0.0
  %959 = vmatprep.subr.mxu0 0.0
  %960 = vmatpush1.msra.mxu0 0.0
  %961 = vmatprep.subr.mxu0 0.0
  %962 = vmatpush1.msra.mxu0 0.0
  %963 = vmatprep.subr.mxu0 0.0
  %964 = vmatpush1.msra.mxu0 0.0
  %965 = vmatprep.subr.mxu0 0.0
  %966 = vmatpush1.msra.mxu0 0.0
  %967 = vmatprep.subr.mxu0 0.0
  %968 = vmatpush1.msra.mxu0 0.0
  %969 = vmatprep.subr.mxu0 0.0
  %970 = vmatpush1.msra.mxu0 0.0
  %971 = vmatprep.subr.mxu0 0.0
  %972 = vmatpush1.msra.mxu0 0.0
  %973 = vmatprep.subr.mxu0 0.0
  %974 = vmatpush1.msra.mxu0 0.0
  %975 = vmatprep.subr.mxu0 0.0
  %976 = vmatpush1.msra.mxu0 0.0
  %977 = vmatprep.subr.mxu0 0.0
  %978 = vmatpush1.msra.mxu0 0.0
  %979 = vmatprep.subr.mxu0 0.0
  %980 = vmatpush1.msra.mxu0 0.0
  %981 = vmatprep.mubr.f32.mxu0 0.0
  %v982 = vand.u32 %v85, 4294901760
  %v983 = vsub.f32 %v85, %v982
  %v984 = vand.u32 %v983, 4294901760
  %985 = vmatmul.mubr.f32.gmra.mrb[0].mxu0 %v984
  %v986 = vpop.f32.mrb[0].mxu0
  %v987 = vadd.f32 %v901, %v986
  %v988 = vpop.f32.mrb[0].mxu0
  %v989 = vadd.f32 %v903, %v988
  %990 = vmatprep.mubr.f32.mxu0 0.0
  %v991 = vand.u32 %v88, 4294901760
  %v992 = vsub.f32 %v88, %v991
  %v993 = vand.u32 %v992, 4294901760
  %994 = vmatmul.mubr.f32.gmra.mrb[0].mxu0 %v993
  %v995 = vpop.f32.mrb[0].mxu0
  %v996 = vadd.f32 %v909, %v995
  %v997 = vpop.f32.mrb[0].mxu0
  %v998 = vadd.f32 %v911, %v997
  %999 = vdwg.mxu0
  %v1000 = vand.u32 %v631, 4294901760
  %v1001 = vsub.f32 %v631, %v1000
  %v1002 = vand.u32 %v1001, 4294901760
  %1003 = vmatprep.subr.mxu0 %v1002
  %v1004 = vand.u32 %v630, 4294901760
  %v1005 = vsub.f32 %v630, %v1004
  %v1006 = vand.u32 %v1005, 4294901760
  %1007 = vmatpush1.msra.mxu0 %v1006
  %v1008 = vand.u32 %v633, 4294901760
  %v1009 = vsub.f32 %v633, %v1008
  %v1010 = vand.u32 %v1009, 4294901760
  %1011 = vmatprep.subr.mxu0 %v1010
  %v1012 = vand.u32 %v632, 4294901760
  %v1013 = vsub.f32 %v632, %v1012
  %v1014 = vand.u32 %v1013, 4294901760
  %1015 = vmatpush1.msra.mxu0 %v1014
  %1016 = vmatprep.subr.mxu0 0.0
  %1017 = vmatpush1.msra.mxu0 0.0
  %1018 = vmatprep.subr.mxu0 0.0
  %1019 = vmatpush1.msra.mxu0 0.0
  %1020 = vmatprep.subr.mxu0 0.0
  %1021 = vmatpush1.msra.mxu0 0.0
  %1022 = vmatprep.subr.mxu0 0.0
  %1023 = vmatpush1.msra.mxu0 0.0
  %1024 = vmatprep.subr.mxu0 0.0
  %1025 = vmatpush1.msra.mxu0 0.0
  %1026 = vmatprep.subr.mxu0 0.0
  %1027 = vmatpush1.msra.mxu0 0.0
  %1028 = vmatprep.subr.mxu0 0.0
  %1029 = vmatpush1.msra.mxu0 0.0
  %1030 = vmatprep.subr.mxu0 0.0
  %1031 = vmatpush1.msra.mxu0 0.0
  %1032 = vmatprep.subr.mxu0 0.0
  %1033 = vmatpush1.msra.mxu0 0.0
  %1034 = vmatprep.subr.mxu0 0.0
  %1035 = vmatpush1.msra.mxu0 0.0
  %1036 = vmatprep.subr.mxu0 0.0
  %1037 = vmatpush1.msra.mxu0 0.0
  %1038 = vmatprep.subr.mxu0 0.0
  %1039 = vmatpush1.msra.mxu0 0.0
  %1040 = vmatprep.subr.mxu0 0.0
  %1041 = vmatpush1.msra.mxu0 0.0
  %1042 = vmatprep.subr.mxu0 0.0
  %1043 = vmatpush1.msra.mxu0 0.0
  %1044 = vmatprep.subr.mxu0 0.0
  %1045 = vmatpush1.msra.mxu0 0.0
  %1046 = vmatprep.subr.mxu0 0.0
  %1047 = vmatpush1.msra.mxu0 0.0
  %1048 = vmatprep.subr.mxu0 0.0
  %1049 = vmatpush1.msra.mxu0 0.0
  %1050 = vmatprep.subr.mxu0 0.0
  %1051 = vmatpush1.msra.mxu0 0.0
  %1052 = vmatprep.subr.mxu0 0.0
  %1053 = vmatpush1.msra.mxu0 0.0
  %1054 = vmatprep.subr.mxu0 0.0
  %1055 = vmatpush1.msra.mxu0 0.0
  %1056 = vmatprep.subr.mxu0 0.0
  %1057 = vmatpush1.msra.mxu0 0.0
  %1058 = vmatprep.subr.mxu0 0.0
  %1059 = vmatpush1.msra.mxu0 0.0
  %1060 = vmatprep.subr.mxu0 0.0
  %1061 = vmatpush1.msra.mxu0 0.0
  %1062 = vmatprep.subr.mxu0 0.0
  %1063 = vmatpush1.msra.mxu0 0.0
  %1064 = vmatprep.subr.mxu0 0.0
  %1065 = vmatpush1.msra.mxu0 0.0
  %1066 = vmatprep.subr.mxu0 0.0
  %1067 = vmatpush1.msra.mxu0 0.0
  %1068 = vmatprep.subr.mxu0 0.0
  %1069 = vmatpush1.msra.mxu0 0.0
  %1070 = vmatprep.subr.mxu0 0.0
  %1071 = vmatpush1.msra.mxu0 0.0
  %1072 = vmatprep.subr.mxu0 0.0
  %1073 = vmatpush1.msra.mxu0 0.0
  %1074 = vmatprep.subr.mxu0 0.0
  %1075 = vmatpush1.msra.mxu0 0.0
  %1076 = vmatprep.mubr.f32.mxu0 0.0
  %v1077 = vand.u32 %v85, 4294901760
  %1078 = vmatmul.mubr.f32.gmra.mrb[0].mxu0 %v1077
  %v1079 = vpop.f32.mrb[0].mxu0
  %v1080 = vadd.f32 %v987, %v1079
  %v1081 = vpop.f32.mrb[0].mxu0
  %v1082 = vadd.f32 %v989, %v1081
  %1083 = vmatprep.mubr.f32.mxu0 0.0
  %v1084 = vand.u32 %v88, 4294901760
  %1085 = vmatmul.mubr.f32.gmra.mrb[0].mxu0 %v1084
  %v1086 = vpop.f32.mrb[0].mxu0
  %v1087 = vadd.f32 %v996, %v1086
  %v1088 = vpop.f32.mrb[0].mxu0
  %v1089 = vadd.f32 %v998, %v1088
  %1090 = vdwg.mxu0
  %v1091 = vand.u32 %v631, 4294901760
  %1092 = vmatprep.subr.mxu0 %v1091
  %v1093 = vand.u32 %v630, 4294901760
  %1094 = vmatpush1.msra.mxu0 %v1093
  %v1095 = vand.u32 %v633, 4294901760
  %1096 = vmatprep.subr.mxu0 %v1095
  %v1097 = vand.u32 %v632, 4294901760
  %1098 = vmatpush1.msra.mxu0 %v1097
  %1099 = vmatprep.subr.mxu0 0.0
  %1100 = vmatpush1.msra.mxu0 0.0
  %1101 = vmatprep.subr.mxu0 0.0
  %1102 = vmatpush1.msra.mxu0 0.0
  %1103 = vmatprep.subr.mxu0 0.0
  %1104 = vmatpush1.msra.mxu0 0.0
  %1105 = vmatprep.subr.mxu0 0.0
  %1106 = vmatpush1.msra.mxu0 0.0
  %1107 = vmatprep.subr.mxu0 0.0
  %1108 = vmatpush1.msra.mxu0 0.0
  %1109 = vmatprep.subr.mxu0 0.0
  %1110 = vmatpush1.msra.mxu0 0.0
  %1111 = vmatprep.subr.mxu0 0.0
  %1112 = vmatpush1.msra.mxu0 0.0
  %1113 = vmatprep.subr.mxu0 0.0
  %1114 = vmatpush1.msra.mxu0 0.0
  %1115 = vmatprep.subr.mxu0 0.0
  %1116 = vmatpush1.msra.mxu0 0.0
  %1117 = vmatprep.subr.mxu0 0.0
  %1118 = vmatpush1.msra.mxu0 0.0
  %1119 = vmatprep.subr.mxu0 0.0
  %1120 = vmatpush1.msra.mxu0 0.0
  %1121 = vmatprep.subr.mxu0 0.0
  %1122 = vmatpush1.msra.mxu0 0.0
  %1123 = vmatprep.subr.mxu0 0.0
  %1124 = vmatpush1.msra.mxu0 0.0
  %1125 = vmatprep.subr.mxu0 0.0
  %1126 = vmatpush1.msra.mxu0 0.0
  %1127 = vmatprep.subr.mxu0 0.0
  %1128 = vmatpush1.msra.mxu0 0.0
  %1129 = vmatprep.subr.mxu0 0.0
  %1130 = vmatpush1.msra.mxu0 0.0
  %1131 = vmatprep.subr.mxu0 0.0
  %1132 = vmatpush1.msra.mxu0 0.0
  %1133 = vmatprep.subr.mxu0 0.0
  %1134 = vmatpush1.msra.mxu0 0.0
  %1135 = vmatprep.subr.mxu0 0.0
  %1136 = vmatpush1.msra.mxu0 0.0
  %1137 = vmatprep.subr.mxu0 0.0
  %1138 = vmatpush1.msra.mxu0 0.0
  %1139 = vmatprep.subr.mxu0 0.0
  %1140 = vmatpush1.msra.mxu0 0.0
  %1141 = vmatprep.subr.mxu0 0.0
  %1142 = vmatpush1.msra.mxu0 0.0
  %1143 = vmatprep.subr.mxu0 0.0
  %1144 = vmatpush1.msra.mxu0 0.0
  %1145 = vmatprep.subr.mxu0 0.0
  %1146 = vmatpush1.msra.mxu0 0.0
  %1147 = vmatprep.subr.mxu0 0.0
  %1148 = vmatpush1.msra.mxu0 0.0
  %1149 = vmatprep.subr.mxu0 0.0
  %1150 = vmatpush1.msra.mxu0 0.0
  %1151 = vmatprep.subr.mxu0 0.0
  %1152 = vmatpush1.msra.mxu0 0.0
  %1153 = vmatprep.subr.mxu0 0.0
  %1154 = vmatpush1.msra.mxu0 0.0
  %1155 = vmatprep.subr.mxu0 0.0
  %1156 = vmatpush1.msra.mxu0 0.0
  %1157 = vmatprep.subr.mxu0 0.0
  %1158 = vmatpush1.msra.mxu0 0.0
  %1159 = vmatprep.mubr.f32.mxu0 0.0
  %v1160 = vand.u32 %v85, 4294901760
  %1161 = vmatmul.mubr.f32.gmra.mrb[0].mxu0 %v1160
  %v1162 = vpop.f32.mrb[0].mxu0
  %v1163 = vadd.f32 %v1080, %v1162
  %v1164 = vpop.f32.mrb[0].mxu0
  %v1165 = vadd.f32 %v1082, %v1164
  %1166 = vmatprep.mubr.f32.mxu0 0.0
  %v1167 = vand.u32 %v88, 4294901760
  %1168 = vmatmul.mubr.f32.gmra.mrb[0].mxu0 %v1167
  %v1169 = vpop.f32.mrb[0].mxu0
  %v1170 = vadd.f32 %v1087, %v1169
  %v1171 = vpop.f32.mrb[0].mxu0
  %v1172 = vadd.f32 %v1089, %v1171
  %1173 = vdwg.mxu0
  %v1174 = vld [vmem:[%s3] sm:$0x3]
  %v1176 = vlaneseq
  %v1177 = vshrl.u32 %v1176, 7
  %v1178 = vsub.s32 0, %v1177
  %v1179 = vrot.slane %v1174, %v1178
  %v1180 = vlaneseq
  %v1181 = vshrl.u32 %v1180, 7
  %v1182 = vsub.s32 1, %v1181
  %v1183 = vrot.slane %v1174, %v1182
  %v1186 = vsub.f32 %v1179, %v1163
  %v1187 = vsub.f32 %v1183, %v1165
  %v1188 = vsub.f32 %v1179, %v1170
  %v1189 = vsub.f32 %v1183, %v1172
  %v1190 = vmul.f32 %v619, %v1186
  %v1191 = vmul.f32 %v621, %v1187
  %v1192 = vmul.f32 %v626, %v1188
  %v1193 = vmul.f32 %v628, %v1189
  %v1194 = vld [vmem:[%s2] sm:$0xff]
  %v1195 = vld [vmem:[%s2 + $0x8] sm:$0xff]
  %v1196 = vld [vmem:[%s2 + $0x10] sm:$0xff]
  %v1197 = vld [vmem:[%s2 + $0x18] sm:$0xff]
  %v1198 = vmul.f32 %v1194, %v1190
  %v1199 = vmul.f32 %v1195, %v1191
  %v1200 = vmul.f32 %v1196, %v1192
  %v1201 = vmul.f32 %v1197, %v1193
  %v1202 = vadd.f32 %v1198, %v1199
  %1203 = vadd.xlane.f32.xlu0 %v1202
  %v1204 = vpop.xlane.xlu0 %1203
  %v1205 = vadd.f32 %v1200, %v1201
  %1206 = vadd.xlane.f32.xlu0 %v1205
  %v1207 = vpop.xlane.xlu0 %1206
  %v1208 = vmul.f32 %v1204, 0.5
  %v1209 = vmul.f32 %v1207, 0.5
  %v1210 = vadd.f32 %v78, %v1208
  %v1211 = vadd.f32 %v79, %v1209
  %v1214 = vlaneseq
  %v1215 = vshrl.u32 %v1214, 7
  %v1216 = vsub.s32 %v67, %v1215
  %v1217 = vrot.slane %v1210, %v1216
  %v1218 = vadd.s32 %v67, 4294967288
  %v1219 = vlaneseq
  %v1220 = vshrl.u32 %v1219, 7
  %v1221 = vsub.s32 %v1218, %v1220
  %v1222 = vrot.slane %v1211, %v1221
  %vm1223 = vcmask 130112
  %v1224 = vsel %vm1223, %v1222, %v1217
  %vm1226 = vcmask 122880
  %1227 = vst.msk [vmem:[%s6] sm:$0x1] %vm1226, %v1224
  // Predicated region
  $region26: #{cov_quadratic_cross_entropy_loss.1} parent=0 // pred_check
    _
  $region27: #{cov_quadratic_cross_entropy_loss.1} parent=0 // pred_check_branch
    %1229 = sbr.rel (0) target = $region29
  $region28: #{cov_quadratic_cross_entropy_loss.1} parent=0 // pred_region
    _
  $region29: #{cov_quadratic_cross_entropy_loss.1} parent=0 // pred_fallthru
    _
  // Predicated region
  $region30: #{cov_quadratic_cross_entropy_loss.1} parent=0 // pred_check
    _
  $region31: #{cov_quadratic_cross_entropy_loss.1} parent=0 // pred_check_branch
    %1231 = sbr.rel (0) target = $region33
  $region32: #{cov_quadratic_cross_entropy_loss.1} parent=0 // pred_region
    _
  $region33: #{cov_quadratic_cross_entropy_loss.1} parent=0 // pred_fallthru
    _

</llo_original>
